<compile_context>
chip_gen: v5e
topology: v5e:2x2
jax: 0.10.0
libtpu: 0.0.40
codegen_flags: <defaults>
</compile_context>

<pallas_src>
import functools

import jax
import jax.numpy as jnp
from jax.experimental import pallas as pl
from jax.experimental.pallas import tpu as pltpu


def _round_up(n: int, m: int) -> int:
    return (n + m - 1) // m * m


def _cdiv(n: int, m: int) -> int:
    return (n + m - 1) // m


# --------------------------------------------------------------------------
# Degenerate Linear(1, 1) path: pure VPU FMA on a lane-dense batch slab.
# --------------------------------------------------------------------------
def _fma_1x1_kernel(w_ref, b_ref, x_ref, o_ref):
    # w_ref, b_ref: (1,) SMEM scalars.  x_ref / o_ref: (TR, 128) VMEM tiles of
    # the flattened batch.  Single VPU fused multiply-add, no MXU involvement.
    o_ref[...] = x_ref[...] * w_ref[0] + b_ref[0]


def _linear_1x1(x, w, b, *, max_rows_per_tile: int = 512):
    """y = x * w + b for x: [B, 1], w: [1, 1], b: [1]."""
    B = x.shape[0]
    dtype = x.dtype
    LANES = 128

    # Lane-dense layout of the length-B batch vector: (R, 128) with R >= 8 so
    # every tile obeys the (8, 128) rule; minimal over-padding (<= 7 rows).
    R = max(_cdiv(B, LANES), 8)
    n_tiles = _cdiv(R, max_rows_per_tile)
    TR = _round_up(_cdiv(R, n_tiles), 8)
    R_pad = _round_up(R, TR)

    x_flat = jnp.zeros((R_pad * LANES,), dtype).at[:B].set(x.reshape(-1))
    x2d = x_flat.reshape(R_pad, LANES)

    w_s = w.reshape(1).astype(dtype)   # scalar weight
    b_s = b.reshape(1).astype(dtype)   # scalar bias

    out2d = pl.pallas_call(
        _fma_1x1_kernel,
        out_shape=jax.ShapeDtypeStruct((R_pad, LANES), dtype),
        grid=(R_pad // TR,),
        in_specs=[
            pl.BlockSpec(memory_space=pltpu.MemorySpace.SMEM),  # w scalar
            pl.BlockSpec(memory_space=pltpu.MemorySpace.SMEM),  # b scalar
            pl.BlockSpec((TR, LANES), lambda i: (i, 0)),        # x slab tile
        ],
        out_specs=pl.BlockSpec((TR, LANES), lambda i: (i, 0)),
        compiler_params=pltpu.CompilerParams(
            dimension_semantics=("parallel",)),
    )(w_s, b_s, x2d)

    return out2d.reshape(R_pad * LANES)[:B].reshape(B, 1)


# --------------------------------------------------------------------------
# General (K, N) fallback path: MXU matmul with f32 accumulation.
# --------------------------------------------------------------------------
def _matmul_kernel(x_ref, w_ref, b_ref, o_ref):
    acc = jnp.dot(x_ref[...], w_ref[...], preferred_element_type=jnp.float32)
    o_ref[...] = (acc + b_ref[...]).astype(o_ref.dtype)


def _linear_general(x, w, b, *, max_batch_tile: int = 512):
    """y = x @ w + b for general K, N (not used by this 1x1 module)."""
    B, K = x.shape
    N = w.shape[1]

    # Only pad N (weights/bias/output last dim) to a lane-dense multiple of
    # 128.  K stays unpadded: the x block uses the full-K extent, which is
    # exempt from the 128-lane rule, so x's HBM traffic is not inflated.
    N_pad = _round_up(N, 128)

    # Minimal batch over-padding (<= 7 rows).
    n_tiles = _cdiv(B, max_batch_tile)
    TB = _round_up(_cdiv(B, n_tiles), 8)
    B_pad = _round_up(B, TB)

    x_p = jnp.zeros((B_pad, K), x.dtype).at[:B, :].set(x)
    w_p = jnp.zeros((K, N_pad), w.dtype).at[:, :N].set(w)
    b_p = jnp.zeros((1, N_pad), b.dtype).at[0, :N].set(b)

    out_p = pl.pallas_call(
        _matmul_kernel,
        out_shape=jax.ShapeDtypeStruct((B_pad, N_pad), x.dtype),
        grid=(B_pad // TB,),
        in_specs=[
            pl.BlockSpec((TB, K), lambda i: (i, 0)),        # x: batch-tiled
            # W / b: constant index_map -> VMEM-resident; single-buffered
            # (double-buffering a constant block is pure VMEM waste).
            pl.BlockSpec((K, N_pad), lambda i: (0, 0),
                         pipeline_mode=pl.Buffered(1)),
            pl.BlockSpec((1, N_pad), lambda i: (0, 0),
                         pipeline_mode=pl.Buffered(1)),
        ],
        out_specs=pl.BlockSpec((TB, N_pad), lambda i: (i, 0)),
        compiler_params=pltpu.CompilerParams(
            dimension_semantics=("parallel",)),
    )(x_p, w_p, b_p)

    return out_p[:B, :N]


# --------------------------------------------------------------------------
# Public wrapper (forward pass of the LinearRegression module).
# --------------------------------------------------------------------------
@jax.jit
def linear_regression(x, w, b):
    """Forward pass: x @ w + b.

    x: [B, in_dim]
    w: [in_dim, out_dim]   (transpose of PyTorch nn.Linear.weight [out, in])
    b: [out_dim]
    returns [B, out_dim]
    """
    _, K = x.shape
    N = w.shape[1]
    if K == 1 and N == 1:
        return _linear_1x1(x, w, b)     # this module's case: VPU FMA path
    return _linear_general(x, w, b)     # generic fallback: MXU matmul path


def _init_linear(key, fan_in, fan_out):
    """Deterministic init mimicking nn.Linear's U(-1/sqrt(fan_in), 1/sqrt(fan_in))."""
    kw, kb = jax.random.split(key)
    bound = 1.0 / jnp.sqrt(jnp.float32(fan_in))
    w = jax.random.uniform(kw, (fan_in, fan_out), jnp.float32, -bound, bound)
    b = jax.random.uniform(kb, (fan_out,), jnp.float32, -bound, bound)
    return w, b


if __name__ == "__main__":
    # LinearRegression: nn.Linear(1, 1) applied to a [B, 1] batch.
    B, in_dim, out_dim = 8, 1, 1

    key = jax.random.PRNGKey(0)
    kx, kl = jax.random.split(key)

    x = jax.random.normal(kx, (B, in_dim), jnp.float32)
    w, b = _init_linear(kl, in_dim, out_dim)

    out = linear_regression(x, w, b)
    jax.block_until_ready(out)

    # Pure-JAX reference check.
    ref = x @ w + b
    assert out.shape == (B, out_dim)
    assert jnp.allclose(out, ref, atol=1e-5, rtol=1e-5), "mismatch vs reference"

    print("KERNEL_OK")
</pallas_src>

<mosaic_0001>
module attributes {stable_mosaic.version = 11 : i64} {
  func.func @_fma_1x1_kernel(%arg0: i32, %arg1: memref<1xf32, #tpu.memory_space<smem>>, %arg2: memref<1xf32, #tpu.memory_space<smem>>, %arg3: memref<8x128xf32, #tpu.memory_space<vmem>>, %arg4: memref<8x128xf32, #tpu.memory_space<vmem>>) attributes {dimension_semantics = [#tpu.dimension_semantics<parallel>], iteration_bounds = array<i64: 1>, scalar_prefetch = 0 : i64, scratch_operands = 0 : i64, tpu.core_type = #tpu.core_type<tc>, window_params = [{transform_indices = @transform_0, window_bounds = array<i64: 1>}, {transform_indices = @transform_1, window_bounds = array<i64: 1>}, {transform_indices = @transform_2, window_bounds = array<i64: 8, 128>}, {transform_indices = @transform_3, window_bounds = array<i64: 8, 128>}]} {
    %c0 = arith.constant 0 : index
    %c0_0 = arith.constant 0 : index
    %0 = vector.load %arg3[%c0, %c0_0] : memref<8x128xf32, #tpu.memory_space<vmem>>, vector<8x128xf32>
    %c0_1 = arith.constant 0 : index
    %1 = memref.load %arg1[%c0_1] : memref<1xf32, #tpu.memory_space<smem>>
    %2 = vector.broadcast %1 : f32 to vector<8x128xf32>
    %3 = arith.mulf %0, %2 : vector<8x128xf32>
    %c0_2 = arith.constant 0 : index
    %4 = memref.load %arg2[%c0_2] : memref<1xf32, #tpu.memory_space<smem>>
    %5 = vector.broadcast %4 : f32 to vector<8x128xf32>
    %6 = arith.addf %3, %5 : vector<8x128xf32>
    %c0_3 = arith.constant 0 : index
    %c0_4 = arith.constant 0 : index
    %7 = vector.load %arg4[%c0_3, %c0_4] : memref<8x128xf32, #tpu.memory_space<vmem>>, vector<8x128xf32>
    tpu.vector_store %arg4[%c0_3, %c0_4], %6 {strides = array<i32>} : memref<8x128xf32, #tpu.memory_space<vmem>>, vector<8x128xf32>,
    return
  }
  func.func @transform_0(%arg0: i32) -> i32 {
    %c0_i32 = arith.constant 0 : i32
    %c0_i32_0 = arith.constant 0 : i32
    return %c0_i32 : i32
  }
  func.func @transform_1(%arg0: i32) -> i32 {
    %c0_i32 = arith.constant 0 : i32
    %c0_i32_0 = arith.constant 0 : i32
    return %c0_i32 : i32
  }
  func.func @transform_2(%arg0: i32) -> (i32, i32) {
    %c0_i32 = arith.constant 0 : i32
    %c0_i32_0 = arith.constant 0 : i32
    return %arg0, %c0_i32 : i32, i32
  }
  func.func @transform_3(%arg0: i32) -> (i32, i32) {
    %c0_i32 = arith.constant 0 : i32
    %c0_i32_0 = arith.constant 0 : i32
    return %arg0, %c0_i32 : i32, i32
  }
}

</mosaic_0001>

<llo_original>
// kernel: linear_regression.1
$region0: #{linear_regression.1}
  #allocation0 [shape = 'u32[]', space=smem, size = 0x4, offset = 0x4, fixed_abs, tag = 'smem constant byte address 0x4 - core index']
  #allocation1 [shape = 'u32[72,128]{1,0:T(1,128)}', space=vmem, size = 0x9000, scoped, tag = 'internal scratch']
  #allocation2 [shape = 'f32[1]{0:T(128)S(6)}', space=smem, size = 0x200, scoped, tag = 'scoped memory for linear_regression.1']
  #allocation3 [shape = 'f32[1]{0:T(128)S(6)}', space=smem, size = 0x200, scoped, tag = 'scoped memory for linear_regression.1']
  %s0 = inlined_call_operand.<no memory space> [shape: f32[1], index: 0, kind: input, shape index: {}]
  %s1 = inlined_call_operand.<no memory space> [shape: f32[1], index: 1, kind: input, shape index: {}]
  %s2 = inlined_call_operand.vmem [shape: f32[8,128], index: 2, kind: input, shape index: {}]
  %s3 = inlined_call_operand.vmem [shape: f32[8,128], index: 3, kind: output, shape index: {}]
  %s4 = sld [smem:[#allocation0]]
  $region22: #{linear_regression.1} parent=0
    _
  %s6 = ssub.s32 1, %s4
  %s7 = scalar_select 0, %s6, %s4
  %8 = sst [smem:[#allocation2]] %s0
  %9 = sst [smem:[#allocation3]] %s1
  // Predicated region
  $region2: #{linear_regression.1} parent=0 // pred_check
    _
  $region3: #{linear_regression.1} parent=0 // pred_check_branch
    %11 = sbr.rel (0) target = $region5
  $region4: #{linear_regression.1} parent=0 // pred_region
    _
  $region5: #{linear_regression.1} parent=0 // pred_fallthru
    _
  // Predicated region
  $region6: #{linear_regression.1} parent=0 // pred_check
    _
  $region7: #{linear_regression.1} parent=0 // pred_check_branch
    %13 = sbr.rel (0) target = $region9
  $region8: #{linear_regression.1} parent=0 // pred_region
    _
  $region9: #{linear_regression.1} parent=0 // pred_fallthru
    _
  // Predicated region
  $region10: #{linear_regression.1} parent=0 // pred_check
    _
  $region11: #{linear_regression.1} parent=0 // pred_check_branch
    %15 = sbr.rel (0) target = $region13
  $region12: #{linear_regression.1} parent=0 // pred_region
    _
  $region13: #{linear_regression.1} parent=0 // pred_fallthru
    _
  %v16 = vld [vmem:[%s2] sm:$0xff]
  %s17 = sld [smem:[#allocation2]]
  %v18 = vstv %s17
  %v19 = vmul.f32 %v16, %v18
  %s20 = sld [smem:[#allocation3]]
  %v21 = vstv %s20
  %v22 = vadd.f32 %v19, %v21
  %23 = vst [vmem:[%s3] sm:$0xff] %v22
  // Predicated region
  $region14: #{linear_regression.1} parent=0 // pred_check
    _
  $region15: #{linear_regression.1} parent=0 // pred_check_branch
    %25 = sbr.rel (0) target = $region17
  $region16: #{linear_regression.1} parent=0 // pred_region
    _
  $region17: #{linear_regression.1} parent=0 // pred_fallthru
    _
  // Predicated region
  $region18: #{linear_regression.1} parent=0 // pred_check
    _
  $region19: #{linear_regression.1} parent=0 // pred_check_branch
    %27 = sbr.rel (0) target = $region21
  $region20: #{linear_regression.1} parent=0 // pred_region
    _
  $region21: #{linear_regression.1} parent=0 // pred_fallthru
    _

</llo_original>
